<compile_context>
chip_gen: v7x
topology: tpu7x:2x2x1
jax: 0.10.0
libtpu: 0.0.40
codegen_flags: <defaults>
</compile_context>

<pallas_src>
import functools

import jax
import jax.numpy as jnp
from jax.experimental import pallas as pl
from jax.experimental.pallas import tpu as pltpu


def _lr_kernel(vals_ref, mask_ref, mval_ref, bias_ref, out_ref):
    # vals_ref: (F, TB) f32  -- fused per-(field, batch) scores score[idx], batch on lanes
    # mask_ref: (M, TB) i32  -- per-batch field indices of the "numerical" features
    # mval_ref: (M, TB) f32  -- per-batch mask values (scaling applied only where NaN)
    # bias_ref: (1, 1)  f32  -- combined bias (F * fc_bias + linear bias), in SMEM
    # out_ref:  (1, TB) f32  -- sigmoid(logits), lane-dense over batch
    vals = vals_ref[...]                                               # (F, TB)
    mask = mask_ref[...]                                               # (M, TB)
    mval = mval_ref[...]                                               # (M, TB)

    # Faithful reference semantics: multiply field `mask[m, b]` by mask_value[m, b]
    # ONLY where the mask value is NaN (pd.isnull).  Compare/product form — pure VPU.
    field_ids = jax.lax.broadcasted_iota(jnp.int32, vals.shape, 0)     # (F, TB)
    upd = jnp.where(jnp.isnan(mval), mval, jnp.float32(1.0))           # (M, TB)
    scale = jnp.ones_like(vals)                                        # (F, TB)
    for m in range(mask.shape[0]):                                     # static, small M
        hit = field_ids == mask[m:m + 1, :]                            # (F, TB)
        scale = scale * jnp.where(hit, upd[m:m + 1, :], jnp.float32(1.0))

    contrib = vals * scale                                             # VPU
    logits = jnp.sum(contrib, axis=0, keepdims=True)                   # XLU sublane reduce
    logits = logits + bias_ref[0, 0]
    out_ref[...] = jax.nn.sigmoid(logits)                              # EUP


def _round_up(x, m):
    return ((x + m - 1) // m) * m


def _cdiv(a, b):
    return (a + b - 1) // b


def precompute_field_scores(table, fc_w):
    """Batch-independent fusion of the embedding table with Linear(D, 1).

    Compute once per weight update and cache — do NOT re-run per forward call.
    """
    return table.astype(jnp.float32) @ fc_w.reshape(-1).astype(jnp.float32)   # (V,)


def lr_forward(features, mask, mask_value, *, offsets, score, fc_b, lin_b,
               batch_tile=2048):
    """features: (B, F) int32, mask: (B, M) int32, mask_value: (B, M) f32 -> (B,) f32."""
    B, F = features.shape
    M = mask.shape[1]

    # ---- glue (plain XLA), already in lane-dense (rows, batch) layout -----------------
    idx_t = features.T.astype(jnp.int32) + offsets[:, None].astype(jnp.int32)   # (F, B)
    # TODO(synk): the data-dependent gather score[idx] is left to XLA; there is no robust
    # generic in-kernel dynamic-gather primitive for arbitrary vocab sizes on TPU Pallas.
    vals_t = jnp.take(score, idx_t, axis=0).astype(jnp.float32)                 # (F, B)
    mask_t = mask.T.astype(jnp.int32)                                            # (M, B)
    mval_t = mask_value.T.astype(jnp.float32)                                    # (M, B)

    # ---- batch tiling: lane-dense (multiple of 128), >=2 grid steps when possible -----
    B_pad = _round_up(B, 128)
    TB = min(batch_tile, max(128, _round_up(_cdiv(B_pad, 2), 128)))
    B_pad = _round_up(B_pad, TB)
    pad = B_pad - B
    if pad:
        vals_t = jnp.pad(vals_t, ((0, 0), (0, pad)))
        mask_t = jnp.pad(mask_t, ((0, 0), (0, pad)))
        mval_t = jnp.pad(mval_t, ((0, 0), (0, pad)))   # pads are finite -> scale = 1

    total_bias = (F * fc_b.reshape(()) + lin_b.reshape(())).reshape(1, 1).astype(jnp.float32)

    # ---- Pallas kernel: in-kernel mask scale, field-sum, bias, sigmoid -----------------
    out = pl.pallas_call(
        _lr_kernel,
        out_shape=jax.ShapeDtypeStruct((1, B_pad), jnp.float32),
        grid=(B_pad // TB,),
        in_specs=[
            pl.BlockSpec((F, TB), lambda i: (0, i)),                    # fused scores
            pl.BlockSpec((M, TB), lambda i: (0, i)),                    # mask field ids
            pl.BlockSpec((M, TB), lambda i: (0, i)),                    # mask values
            pl.BlockSpec(memory_space=pltpu.MemorySpace.SMEM),          # bias scalar
        ],
        out_specs=pl.BlockSpec((1, TB), lambda i: (0, i)),
        compiler_params=pltpu.CompilerParams(dimension_semantics=("parallel",)),
    )(vals_t, mask_t, mval_t, total_bias)

    return out[0, :B]   # == torch.sigmoid(x.squeeze(1)), shape (B,)


def _lr_reference(features, mask, mask_value, *, offsets, table, fc_w, fc_b, lin_b):
    """Pure-JAX reference (unfused), mirrors the PyTorch module."""
    B, F = features.shape
    idx = features.astype(jnp.int32) + offsets[None, :].astype(jnp.int32)
    emb = table[idx]                                                    # (B, F, D)
    upd = jnp.where(jnp.isnan(mask_value), mask_value, 1.0).astype(jnp.float32)
    scale = jnp.ones((B, F), jnp.float32)
    scale = scale.at[jnp.arange(B)[:, None], mask].multiply(upd)
    emb = emb * scale[..., None]
    per_field = jnp.einsum("bfd,d->bf", emb, fc_w.reshape(-1)) + fc_b.reshape(())
    logits = per_field.sum(axis=1) + lin_b.reshape(())
    return jax.nn.sigmoid(logits)


if __name__ == "__main__":
    key = jax.random.PRNGKey(0)
    k_tab, k_w, k_b, k_feat, k_mask = jax.random.split(key, 5)

    # Small synthetic config.
    field_dims = [3, 4, 5, 6, 7, 8, 9, 10]          # F = 8 fields, vocab V = 52
    embed_dim = 32
    B = 2
    F = len(field_dims)
    V = sum(field_dims)
    offsets = jnp.asarray(
        [0] + list(jnp.cumsum(jnp.asarray(field_dims))[:-1]), dtype=jnp.int32
    )

    # Deterministic parameter init (xavier-uniform style for the embedding table).
    bound = (6.0 / (V + embed_dim)) ** 0.5
    table = jax.random.uniform(k_tab, (V, embed_dim), jnp.float32, -bound, bound)
    fc_w = jax.random.normal(k_w, (1, embed_dim), jnp.float32) * 0.05  # Linear(D, 1).weight
    fc_b = jax.random.normal(k_b, (1,), jnp.float32) * 0.05            # Linear(D, 1).bias
    lin_b = jnp.zeros((1,), jnp.float32)                               # FeaturesLinear bias

    # Batch-independent fused scores: computed once, reused across forward calls.
    score = jax.block_until_ready(precompute_field_scores(table, fc_w))

    fwd = jax.jit(functools.partial(
        lr_forward, offsets=offsets, score=score, fc_b=fc_b, lin_b=lin_b))

    # --- case 1: tiny batch (single 128-lane tile) -------------------------------------
    feat_cols = []
    for j, fd in enumerate(field_dims):
        kj = jax.random.fold_in(k_feat, j)
        feat_cols.append(jax.random.randint(kj, (B,), 0, fd, jnp.int32))
    features = jnp.stack(feat_cols, axis=1)                            # (B, F) int32
    mask = jnp.asarray([[0, 2, 5], [1, 3, 6]], dtype=jnp.int32)        # (B, 3)
    mask_value = jax.random.uniform(k_mask, (B, 3), jnp.float32)       # finite -> loop no-op
    # TODO(synk): the reference scales only when pd.isnull(mask_value) (multiplying by NaN);
    # the mechanism is implemented faithfully, the demo uses finite values to keep output finite.

    out = fwd(features, mask, mask_value)
    jax.block_until_ready(out)
    assert out.shape == (B,) and out.dtype == jnp.float32

    ref = _lr_reference(features, mask, mask_value,
                        offsets=offsets, table=table, fc_w=fc_w, fc_b=fc_b, lin_b=lin_b)
    assert bool(jnp.allclose(out, ref, atol=1e-5, rtol=1e-5)), (out, ref)

    # --- case 2: larger batch to exercise padding + the >=2-step parallel grid ---------
    B2 = 260
    feat_cols2 = []
    for j, fd in enumerate(field_dims):
        kj = jax.random.fold_in(jax.random.fold_in(k_feat, 1000), j)
        feat_cols2.append(jax.random.randint(kj, (B2,), 0, fd, jnp.int32))
    features2 = jnp.stack(feat_cols2, axis=1)                          # (B2, F)
    mask2 = jnp.tile(jnp.asarray([[0, 2, 5]], dtype=jnp.int32), (B2, 1))
    mask_value2 = jax.random.uniform(jax.random.fold_in(k_mask, 7), (B2, 3), jnp.float32)

    out2 = fwd(features2, mask2, mask_value2)
    jax.block_until_ready(out2)
    ref2 = _lr_reference(features2, mask2, mask_value2,
                         offsets=offsets, table=table, fc_w=fc_w, fc_b=fc_b, lin_b=lin_b)
    assert out2.shape == (B2,)
    assert bool(jnp.allclose(out2, ref2, atol=1e-5, rtol=1e-5)), (out2, ref2)

    print("KERNEL_OK")
</pallas_src>

<mosaic_0001>
module attributes {stable_mosaic.version = 11 : i64} {
  func.func @_lr_kernel(%arg0: i32, %arg1: memref<8x128xf32, #tpu.memory_space<vmem>>, %arg2: memref<3x128xi32, #tpu.memory_space<vmem>>, %arg3: memref<3x128xf32, #tpu.memory_space<vmem>>, %arg4: memref<1x1xf32, #tpu.memory_space<smem>>, %arg5: memref<1x128xf32, #tpu.memory_space<vmem>>) attributes {dimension_semantics = [#tpu.dimension_semantics<parallel>], iteration_bounds = array<i64: 1>, scalar_prefetch = 0 : i64, scratch_operands = 0 : i64, tpu.core_type = #tpu.core_type<tc>, window_params = [{transform_indices = @transform_0, window_bounds = array<i64: 8, 128>}, {transform_indices = @transform_1, window_bounds = array<i64: 3, 128>}, {transform_indices = @transform_2, window_bounds = array<i64: 3, 128>}, {transform_indices = @transform_3, window_bounds = array<i64: 1, 1>}, {transform_indices = @transform_4, window_bounds = array<i64: 1, 128>}]} {
    %c0 = arith.constant 0 : index
    %c0_0 = arith.constant 0 : index
    %0 = vector.load %arg1[%c0, %c0_0] : memref<8x128xf32, #tpu.memory_space<vmem>>, vector<8x128xf32>
    %c0_1 = arith.constant 0 : index
    %c0_2 = arith.constant 0 : index
    %1 = vector.load %arg2[%c0_1, %c0_2] : memref<3x128xi32, #tpu.memory_space<vmem>>, vector<3x128xi32>
    %c0_3 = arith.constant 0 : index
    %c0_4 = arith.constant 0 : index
    %2 = vector.load %arg3[%c0_3, %c0_4] : memref<3x128xf32, #tpu.memory_space<vmem>>, vector<3x128xf32>
    %3 = tpu.iota {dimensions = array<i32: 0>} : vector<8x128xi32>
    %4 = arith.cmpf one, %2, %2 : vector<3x128xf32>
    %cst = arith.constant 1.000000e+00 : f32
    %5 = vector.broadcast %cst : f32 to vector<3x128xf32>
    %6 = arith.select %4, %2, %5 : vector<3x128xi1>, vector<3x128xf32>
    %cst_5 = arith.constant 1.000000e+00 : f32
    %7 = vector.broadcast %cst_5 : f32 to vector<8x128xf32>
    %8 = vector.extract_strided_slice %1 {offsets = [0, 0], sizes = [1, 128], strides = [1, 1]} : vector<3x128xi32> to vector<1x128xi32>
    %9 = vector.broadcast %8 : vector<1x128xi32> to vector<8x128xi32>
    %10 = arith.cmpi eq, %3, %9 : vector<8x128xi32>
    %11 = vector.extract_strided_slice %6 {offsets = [0, 0], sizes = [1, 128], strides = [1, 1]} : vector<3x128xf32> to vector<1x128xf32>
    %cst_6 = arith.constant 1.000000e+00 : f32
    %12 = vector.shape_cast %11 : vector<1x128xf32> to vector<1x128xf32>
    %13 = vector.broadcast %12 : vector<1x128xf32> to vector<8x128xf32>
    %14 = vector.broadcast %cst_6 : f32 to vector<8x128xf32>
    %15 = arith.select %10, %13, %14 : vector<8x128xi1>, vector<8x128xf32>
    %16 = arith.mulf %7, %15 : vector<8x128xf32>
    %17 = vector.extract_strided_slice %1 {offsets = [1, 0], sizes = [1, 128], strides = [1, 1]} : vector<3x128xi32> to vector<1x128xi32>
    %18 = vector.broadcast %17 : vector<1x128xi32> to vector<8x128xi32>
    %19 = arith.cmpi eq, %3, %18 : vector<8x128xi32>
    %20 = vector.extract_strided_slice %6 {offsets = [1, 0], sizes = [1, 128], strides = [1, 1]} : vector<3x128xf32> to vector<1x128xf32>
    %cst_7 = arith.constant 1.000000e+00 : f32
    %21 = vector.shape_cast %20 : vector<1x128xf32> to vector<1x128xf32>
    %22 = vector.broadcast %21 : vector<1x128xf32> to vector<8x128xf32>
    %23 = vector.broadcast %cst_7 : f32 to vector<8x128xf32>
    %24 = arith.select %19, %22, %23 : vector<8x128xi1>, vector<8x128xf32>
    %25 = arith.mulf %16, %24 : vector<8x128xf32>
    %26 = vector.extract_strided_slice %1 {offsets = [2, 0], sizes = [1, 128], strides = [1, 1]} : vector<3x128xi32> to vector<1x128xi32>
    %27 = vector.broadcast %26 : vector<1x128xi32> to vector<8x128xi32>
    %28 = arith.cmpi eq, %3, %27 : vector<8x128xi32>
    %29 = vector.extract_strided_slice %6 {offsets = [2, 0], sizes = [1, 128], strides = [1, 1]} : vector<3x128xf32> to vector<1x128xf32>
    %cst_8 = arith.constant 1.000000e+00 : f32
    %30 = vector.shape_cast %29 : vector<1x128xf32> to vector<1x128xf32>
    %31 = vector.broadcast %30 : vector<1x128xf32> to vector<8x128xf32>
    %32 = vector.broadcast %cst_8 : f32 to vector<8x128xf32>
    %33 = arith.select %28, %31, %32 : vector<8x128xi1>, vector<8x128xf32>
    %34 = arith.mulf %25, %33 : vector<8x128xf32>
    %35 = arith.mulf %0, %34 : vector<8x128xf32>
    %cst_9 = arith.constant dense<0.000000e+00> : vector<128xf32>
    %36 = vector.multi_reduction <add>, %35, %cst_9 [0] : vector<8x128xf32> to vector<128xf32>
    %37 = vector.shape_cast %36 : vector<128xf32> to vector<1x128xf32>
    %c0_10 = arith.constant 0 : index
    %c0_11 = arith.constant 0 : index
    %38 = memref.load %arg4[%c0_10, %c0_11] : memref<1x1xf32, #tpu.memory_space<smem>>
    %39 = vector.broadcast %38 : f32 to vector<1x128xf32>
    %40 = arith.addf %37, %39 : vector<1x128xf32>
    %41 = arith.negf %40 : vector<1x128xf32>
    %42 = math.exp %41 : vector<1x128xf32>
    %cst_12 = arith.constant 1.000000e+00 : f32
    %43 = vector.broadcast %cst_12 : f32 to vector<1x128xf32>
    %44 = arith.addf %43, %42 : vector<1x128xf32>
    %45 = arith.divf %43, %44 : vector<1x128xf32>
    %c0_13 = arith.constant 0 : index
    %c0_14 = arith.constant 0 : index
    %46 = vector.load %arg5[%c0_13, %c0_14] : memref<1x128xf32, #tpu.memory_space<vmem>>, vector<1x128xf32>
    tpu.vector_store %arg5[%c0_13, %c0_14], %45 {strides = array<i32>} : memref<1x128xf32, #tpu.memory_space<vmem>>, vector<1x128xf32>,
    return
  }
  func.func @transform_0(%arg0: i32) -> (i32, i32) {
    %c0_i32 = arith.constant 0 : i32
    %c0_i32_0 = arith.constant 0 : i32
    return %c0_i32, %arg0 : i32, i32
  }
  func.func @transform_1(%arg0: i32) -> (i32, i32) {
    %c0_i32 = arith.constant 0 : i32
    %c0_i32_0 = arith.constant 0 : i32
    return %c0_i32, %arg0 : i32, i32
  }
  func.func @transform_2(%arg0: i32) -> (i32, i32) {
    %c0_i32 = arith.constant 0 : i32
    %c0_i32_0 = arith.constant 0 : i32
    return %c0_i32, %arg0 : i32, i32
  }
  func.func @transform_3(%arg0: i32) -> (i32, i32) {
    %c0_i32 = arith.constant 0 : i32
    %c0_i32_0 = arith.constant 0 : i32
    %c0_i32_1 = arith.constant 0 : i32
    return %c0_i32, %c0_i32_0 : i32, i32
  }
  func.func @transform_4(%arg0: i32) -> (i32, i32) {
    %c0_i32 = arith.constant 0 : i32
    %c0_i32_0 = arith.constant 0 : i32
    return %c0_i32, %arg0 : i32, i32
  }
}

</mosaic_0001>

<llo_original>
// kernel: lr_forward.1
$region0: #{lr_forward.1}
  #allocation0 [shape = 'u32[]', space=smem, size = 0x4, offset = 0x4, fixed_abs, tag = 'smem constant byte address 0x4 - core index']
  #allocation1 [shape = 'u32[144,128]{1,0:T(1,128)}', space=vmem, size = 0x12000, scoped, tag = 'internal scratch']
  #allocation2 [shape = 'f32[1,1]{1,0:T(1,128)S(6)}', space=smem, size = 0x200, scoped, tag = 'scoped memory for lr_forward.1']
  %s0 = inlined_call_operand.vmem [shape: f32[8,128], index: 0, kind: input, shape index: {}]
  %s1 = inlined_call_operand.vmem [shape: s32[3,128], index: 1, kind: input, shape index: {}]
  %s2 = inlined_call_operand.vmem [shape: f32[3,128], index: 2, kind: input, shape index: {}]
  %s3 = inlined_call_operand.<no memory space> [shape: f32[1,1], index: 3, kind: input, shape index: {}]
  %s4 = inlined_call_operand.vmem [shape: f32[1,128], index: 4, kind: output, shape index: {}]
  %s5 = sld [smem:[#allocation0]]
  $region26: #{lr_forward.1} parent=0
    _
  %s7 = ssub.s32 1, %s5
  %s8 = scalar_select 0, %s7, %s5
  %9 = sst [smem:[#allocation2]] %s3
  // Predicated region
  $region2: #{lr_forward.1} parent=0 // pred_check
    _
  $region3: #{lr_forward.1} parent=0 // pred_check_branch
    %11 = sbr.rel (0) target = $region5
  $region4: #{lr_forward.1} parent=0 // pred_region
    _
  $region5: #{lr_forward.1} parent=0 // pred_fallthru
    _
  // Predicated region
  $region6: #{lr_forward.1} parent=0 // pred_check
    _
  $region7: #{lr_forward.1} parent=0 // pred_check_branch
    %13 = sbr.rel (0) target = $region9
  $region8: #{lr_forward.1} parent=0 // pred_region
    _
  $region9: #{lr_forward.1} parent=0 // pred_fallthru
    _
  // Predicated region
  $region10: #{lr_forward.1} parent=0 // pred_check
    _
  $region11: #{lr_forward.1} parent=0 // pred_check_branch
    %15 = sbr.rel (0) target = $region13
  $region12: #{lr_forward.1} parent=0 // pred_region
    _
  $region13: #{lr_forward.1} parent=0 // pred_fallthru
    _
  // Predicated region
  $region14: #{lr_forward.1} parent=0 // pred_check
    _
  $region15: #{lr_forward.1} parent=0 // pred_check_branch
    %17 = sbr.rel (0) target = $region17
  $region16: #{lr_forward.1} parent=0 // pred_region
    _
  $region17: #{lr_forward.1} parent=0 // pred_fallthru
    _
  %v18 = vld [vmem:[%s0] sm:$0xff]
  %v19 = vld [vmem:[%s1] sm:$0x7]
  %v20 = vld [vmem:[%s2] sm:$0x7]
  %v21 = vlaneseq
  %v22 = vshrl.u32 %v21, 7
  %vm23 = vcmp.ne.f32.partialorder %v20, %v20
  %v24 = vsel %vm23, %v20, 1.0
  %v25 = vlaneseq
  %v26 = vshrl.u32 %v25, 7
  %v27 = vsub.s32 0, %v26
  %v28 = vrot.slane %v19, %v27
  %vm29 = vcmp.eq.s32.totalorder %v22, %v28
  %v30 = vlaneseq
  %v31 = vshrl.u32 %v30, 7
  %v32 = vsub.s32 0, %v31
  %v33 = vrot.slane %v24, %v32
  %v34 = vsel %vm29, %v33, 1.0
  %v35 = vlaneseq
  %v36 = vshrl.u32 %v35, 7
  %v37 = vsub.s32 1, %v36
  %v38 = vrot.slane %v19, %v37
  %vm39 = vcmp.eq.s32.totalorder %v22, %v38
  %v40 = vlaneseq
  %v41 = vshrl.u32 %v40, 7
  %v42 = vsub.s32 1, %v41
  %v43 = vrot.slane %v24, %v42
  %v44 = vsel %vm39, %v43, 1.0
  %v45 = vmul.f32 %v34, %v44
  %v46 = vlaneseq
  %v47 = vshrl.u32 %v46, 7
  %v48 = vsub.s32 2, %v47
  %v49 = vrot.slane %v19, %v48
  %vm50 = vcmp.eq.s32.totalorder %v22, %v49
  %v51 = vlaneseq
  %v52 = vshrl.u32 %v51, 7
  %v53 = vsub.s32 2, %v52
  %v54 = vrot.slane %v24, %v53
  %v55 = vsel %vm50, %v54, 1.0
  %v56 = vmul.f32 %v45, %v55
  %v57 = vmul.f32 %v18, %v56
  %v58 = vrot.slane %v57, 4
  %v59 = vadd.f32 %v57, %v58
  %v60 = vrot.slane %v59, 2
  %v61 = vadd.f32 %v59, %v60
  %v62 = vrot.slane %v61, 1
  %v63 = vadd.f32 %v61, %v62
  %s64 = sld [smem:[#allocation2]]
  %v65 = vstv %s64
  %v66 = vadd.f32 %v63, %v65
  %v67 = vxor.u32 %v66, 2147483648
  %v68 = vmul.f32 %v67, 1.442695
  %v69 = vpow.pop %v68
  %v70 = vadd.f32 %v69, 1.0
  %v71 = vrcp.pop %v70
  %v72 = vmul.f32 1.0, %v71
  %73 = vst [vmem:[%s4] sm:$0x1] %v72
  // Predicated region
  $region18: #{lr_forward.1} parent=0 // pred_check
    _
  $region19: #{lr_forward.1} parent=0 // pred_check_branch
    %75 = sbr.rel (0) target = $region21
  $region20: #{lr_forward.1} parent=0 // pred_region
    _
  $region21: #{lr_forward.1} parent=0 // pred_fallthru
    _
  // Predicated region
  $region22: #{lr_forward.1} parent=0 // pred_check
    _
  $region23: #{lr_forward.1} parent=0 // pred_check_branch
    %77 = sbr.rel (0) target = $region25
  $region24: #{lr_forward.1} parent=0 // pred_region
    _
  $region25: #{lr_forward.1} parent=0 // pred_fallthru
    _

</llo_original>
